<compile_context>
chip_gen: v6e
topology: v6e:2x2x1
jax: 0.10.0
libtpu: 0.0.40
codegen_flags: <defaults>
</compile_context>

<pallas_src>
import functools

import jax
import jax.numpy as jnp
from jax.experimental import pallas as pl
from jax.experimental.pallas import tpu as pltpu


def _round_up(x, m):
    return ((x + m - 1) // m) * m


def _l2dist_kernel(shifts, n_out, compute_dtype,
                   proto_ref, psq_ref, x_ref, out_ref):
    """One (batch, spatial-tile) step: all prototypes vs one flat-spatial tile.

    shifts    : static tuple of flat-spatial shifts (di*H + dj), len T
    n_out     : static number of output lanes produced by this block
    proto_ref : (T, P, D) f32   prototype slice per kernel offset
    psq_ref   : (P, 1)    f32   per-prototype squared L2 norm
    x_ref     : (1, D, NX) f32  flat input spatial (NX >= max(shift) + n_out)
    out_ref   : (1, P, n_out)   sqrt(| ||x||^2 + ||p||^2 - 2 x.p | + 1e-14)
    """
    conv = None
    xsq = None
    for t, s in enumerate(shifts):
        xt = x_ref[0, :, s:s + n_out]                      # (D, n_out) f32
        # xs_squared_l2 term from un-rounded f32 inputs (VALU/XLU filler).
        q = jnp.sum(xt * xt, axis=0, keepdims=True)        # (1, n_out) f32
        if compute_dtype is not None:
            lhs = proto_ref[t].astype(compute_dtype)
            rhs = xt.astype(compute_dtype)
        else:
            lhs, rhs = proto_ref[t], xt
        c = jnp.dot(lhs, rhs, preferred_element_type=jnp.float32)  # (P, n_out)
        conv = c if conv is None else conv + c
        xsq = q if xsq is None else xsq + q
    dist2 = psq_ref[...] + xsq - 2.0 * conv                 # (P, n_out) f32
    out_ref[0] = jnp.sqrt(jnp.abs(dist2) + 1e-14).astype(out_ref.dtype)


@functools.partial(jax.jit, static_argnames=("tn", "out_dtype", "compute_dtype"))
def l2conv2d_forward(xs, prototype_vectors, tn=1024,
                     out_dtype=jnp.float32, compute_dtype=None):
    """Pallas implementation of L2Conv2D.forward.

    xs                : (B, D, W, H)   float32
    prototype_vectors : (P, D, w1, h1) float32
    returns           : (B, P, W-w1+1, H-h1+1) out_dtype (default float32)
    """
    B, D, W, H = xs.shape
    P, Dp, w1, h1 = prototype_vectors.shape
    assert D == Dp
    Wo, Ho = W - w1 + 1, H - h1 + 1
    NF = W * H
    T = w1 * h1

    xs = xs.astype(jnp.float32)
    pv = prototype_vectors.astype(jnp.float32)

    x_flat = xs.reshape(B, D, NF)                       # pure reshape, no copy
    # Prototype slice per kernel offset, t = di*h1 + dj  (tiny host transform).
    protos = jnp.transpose(pv, (2, 3, 0, 1)).reshape(T, P, D)
    proto_sq = jnp.sum(pv * pv, axis=(1, 2, 3)).reshape(P, 1)
    shifts = tuple(di * H + dj for di in range(w1) for dj in range(h1))

    if T == 1:
        # 1x1 prototypes (the shipped ProtoTree config): tile flat spatial.
        n_out_total = NF
        tn_cap = max(128, _round_up(tn, 128))
        if NF <= tn_cap:
            if B == 1 and NF >= 256:
                # keep >=2 parallel grid steps so both v7x TCs get work
                tn_eff = _round_up(pl.cdiv(NF, 2), 128)
            else:
                tn_eff = NF                      # full-dim block, no 128 rule
        else:
            tn_eff = tn_cap
        nj = pl.cdiv(NF, tn_eff)                 # final block may be partial
        grid = (B, nj)
        x_spec = pl.BlockSpec((1, D, tn_eff), lambda b, j: (b, 0, j))
        out_spec = pl.BlockSpec((1, P, tn_eff), lambda b, j: (b, 0, j))
        n_x_blk, n_out_blk = tn_eff, tn_eff
        dims = ("parallel", "parallel")
    else:
        # Multi-pixel prototypes: whole flat image per batch element, shifts
        # done in-kernel.  Valid outputs live at flat index ox*H + oy; extra
        # interleaved columns are discarded on the host.
        # TODO(synk): for very large feature maps this path should tile the
        # spatial axis with a manually DMA'd halo; ProtoTree feature maps are
        # small, so one (D, W*H) slab per batch element is used instead.
        n_out_total = (Wo - 1) * H + Ho          # max shift + n_out == W*H
        grid = (B,)
        x_spec = pl.BlockSpec((1, D, NF), lambda b: (b, 0, 0))
        out_spec = pl.BlockSpec((1, P, n_out_total), lambda b: (b, 0, 0))
        n_x_blk, n_out_blk = NF, n_out_total
        dims = ("parallel",)

    # VMEM budget from actual (layout-padded) blocks; cap at 3/4 of capacity
    # (48 MiB on v7x's 64 MiB, 96 MiB on v5e/v6e's 128 MiB).
    lane = lambda n: _round_up(n, 128)
    sub = lambda n: _round_up(max(n, 1), 8)
    blk_x = sub(D) * lane(n_x_blk) * 4
    blk_o = sub(P) * lane(n_out_blk) * 4
    blk_p = T * sub(P) * lane(D) * 4
    blk_q = sub(P) * 128 * 4
    need = 2 * (blk_x + blk_o) + 2 * (blk_p + blk_q)
    try:
        vmem_cap = pltpu.get_tpu_info().vmem_capacity_bytes
    except Exception:
        vmem_cap = 64 * 1024 * 1024
    vmem_limit = int(min(max(2 * need, 32 * 1024 * 1024),
                         (3 * vmem_cap) // 4,
                         100 * 1024 * 1024))

    kernel = functools.partial(_l2dist_kernel, shifts, n_out_blk, compute_dtype)

    out_flat = pl.pallas_call(
        kernel,
        out_shape=jax.ShapeDtypeStruct((B, P, n_out_total), out_dtype),
        grid_spec=pltpu.PrefetchScalarGridSpec(
            num_scalar_prefetch=0,
            grid=grid,
            in_specs=[
                pl.BlockSpec((T, P, D), lambda *_: (0, 0, 0)),   # prototypes (resident)
                pl.BlockSpec((P, 1), lambda *_: (0, 0)),          # prototype norms
                x_spec,                                            # flat input
            ],
            out_specs=out_spec),
        compiler_params=pltpu.CompilerParams(
            dimension_semantics=dims,
            vmem_limit_bytes=vmem_limit),
    )(protos, proto_sq, x_flat)

    if T == 1:
        return out_flat.reshape(B, P, W, H)        # already NCHW, no copy
    # Drop the interleaved invalid columns: pad to a multiple of H, reshape,
    # keep the first Ho columns of each row.
    out_flat = jnp.pad(out_flat, ((0, 0), (0, 0), (0, h1 - 1)))
    return out_flat.reshape(B, P, Wo, H)[:, :, :, :Ho]


def _reference(xs, protos):
    """Pure-JAX reference mirroring the PyTorch forward (full f32)."""
    ones = jnp.ones_like(protos)
    dn = ("NCHW", "OIHW", "NCHW")
    hi = jax.lax.Precision.HIGHEST
    xs_sq = jax.lax.conv_general_dilated(xs ** 2, ones, (1, 1), "VALID",
                                         dimension_numbers=dn, precision=hi)
    ps_sq = jnp.sum(protos ** 2, axis=(1, 2, 3)).reshape(-1, 1, 1)
    xs_conv = jax.lax.conv_general_dilated(xs, protos, (1, 1), "VALID",
                                           dimension_numbers=dn, precision=hi)
    dist = xs_sq + ps_sq - 2.0 * xs_conv
    return jnp.sqrt(jnp.abs(dist) + 1e-14)


if __name__ == "__main__":
    key = jax.random.PRNGKey(0)
    kx, kp, kx2, kp2, kx3, kp3 = jax.random.split(key, 6)

    # Config 1: the shipped ProtoTree config (1x1 prototypes), single tile.
    B, D, W, H = 2, 4, 16, 16
    P, w1, h1 = 8, 1, 1
    xs = jax.random.normal(kx, (B, D, W, H), dtype=jnp.float32)
    protos = jax.random.normal(kp, (P, D, w1, h1), dtype=jnp.float32)
    out = jax.block_until_ready(l2conv2d_forward(xs, protos))
    assert out.shape == (B, P, W, H), out.shape
    # TODO(synk): the module's runtime NaN-raise has no in-kernel equivalent;
    # checked host-side here instead.
    assert not bool(jnp.isnan(out).any()), "NaN values in distance"
    assert jnp.allclose(out, _reference(xs, protos), atol=5e-3, rtol=5e-3), \
        "mismatch vs f32 reference (1x1 protos)"

    # Config 2: multi-pixel prototypes exercising the in-kernel shift path.
    P2, w2, h2 = 8, 3, 3
    xs2 = jax.random.normal(kx2, (B, D, W, H), dtype=jnp.float32)
    protos2 = jax.random.normal(kp2, (P2, D, w2, h2), dtype=jnp.float32)
    out2 = jax.block_until_ready(l2conv2d_forward(xs2, protos2))
    assert out2.shape == (B, P2, W - w2 + 1, H - h2 + 1), out2.shape
    assert not bool(jnp.isnan(out2).any()), "NaN values in distance"
    assert jnp.allclose(out2, _reference(xs2, protos2), atol=5e-3, rtol=5e-3), \
        "mismatch vs f32 reference (3x3 protos)"

    # Config 3: B=1, non-128-multiple spatial, small tn -> tiled grid with a
    # partial final spatial block (exercises the cdiv / masked-writeback path).
    B3, W3, H3 = 1, 16, 18
    xs3 = jax.random.normal(kx3, (B3, D, W3, H3), dtype=jnp.float32)
    protos3 = jax.random.normal(kp3, (P, D, 1, 1), dtype=jnp.float32)
    out3 = jax.block_until_ready(l2conv2d_forward(xs3, protos3, tn=128))
    assert out3.shape == (B3, P, W3, H3), out3.shape
    assert not bool(jnp.isnan(out3).any()), "NaN values in distance"
    assert jnp.allclose(out3, _reference(xs3, protos3), atol=5e-3, rtol=5e-3), \
        "mismatch vs f32 reference (tiled/partial block)"

    print("KERNEL_OK")
</pallas_src>

<mosaic_0001>
module attributes {stable_mosaic.version = 11 : i64} {
  func.func @_l2dist_kernel(%arg0: i32, %arg1: i32, %arg2: memref<1x8x4xf32, #tpu.memory_space<vmem>>, %arg3: memref<8x1xf32, #tpu.memory_space<vmem>>, %arg4: memref<1x4x256xf32, #tpu.memory_space<vmem>>, %arg5: memref<1x8x256xf32, #tpu.memory_space<vmem>>) attributes {dimension_semantics = [#tpu.dimension_semantics<parallel>, #tpu.dimension_semantics<parallel>], iteration_bounds = array<i64: 2, 1>, scalar_prefetch = 0 : i64, scratch_operands = 0 : i64, tpu.core_type = #tpu.core_type<tc>, window_params = [{pipeline_mode = #tpu.pipeline_mode<synchronous>, transform_indices = @transform_0, window_bounds = array<i64: 1, 8, 4>}, {pipeline_mode = #tpu.pipeline_mode<synchronous>, transform_indices = @transform_1, window_bounds = array<i64: 8, 1>}, {transform_indices = @transform_2, window_bounds = array<i64: 1, 4, 256>}, {transform_indices = @transform_3, window_bounds = array<i64: 1, 8, 256>}]} {
    %c0 = arith.constant 0 : index
    %c0_0 = arith.constant 0 : index
    %c0_1 = arith.constant 0 : index
    %0 = vector.load %arg4[%c0, %c0_0, %c0_1] : memref<1x4x256xf32, #tpu.memory_space<vmem>>, vector<1x4x256xf32>
    %1 = vector.shape_cast %0 : vector<1x4x256xf32> to vector<4x256xf32>
    %2 = arith.mulf %1, %1 : vector<4x256xf32>
    %cst = arith.constant dense<0.000000e+00> : vector<256xf32>
    %3 = vector.multi_reduction <add>, %2, %cst [0] : vector<4x256xf32> to vector<256xf32>
    %4 = vector.shape_cast %3 : vector<256xf32> to vector<1x256xf32>
    %c0_2 = arith.constant 0 : index
    %c0_3 = arith.constant 0 : index
    %c0_4 = arith.constant 0 : index
    %5 = vector.load %arg2[%c0_2, %c0_3, %c0_4] : memref<1x8x4xf32, #tpu.memory_space<vmem>>, vector<1x8x4xf32>
    %6 = vector.shape_cast %5 : vector<1x8x4xf32> to vector<8x4xf32>
    %cst_5 = arith.constant dense<0.000000e+00> : vector<8x256xf32>
    %7 = tpu.matmul %6, %1, %cst_5 {dimension_numbers = #tpu.dot_dimension_numbers<[1], [0], [0], [1], [0, 0, 1, 1], [], []>} : vector<8x4xf32>, vector<4x256xf32>, vector<8x256xf32> -> vector<8x256xf32>
    %c0_6 = arith.constant 0 : index
    %c0_7 = arith.constant 0 : index
    %8 = vector.load %arg3[%c0_6, %c0_7] : memref<8x1xf32, #tpu.memory_space<vmem>>, vector<8x1xf32>
    %9 = vector.broadcast %8 : vector<8x1xf32> to vector<8x256xf32>
    %10 = vector.broadcast %4 : vector<1x256xf32> to vector<8x256xf32>
    %11 = arith.addf %9, %10 : vector<8x256xf32>
    %cst_8 = arith.constant 2.000000e+00 : f32
    %12 = vector.broadcast %cst_8 : f32 to vector<8x256xf32>
    %13 = arith.mulf %12, %7 : vector<8x256xf32>
    %14 = arith.subf %11, %13 : vector<8x256xf32>
    %15 = math.absf %14 : vector<8x256xf32>
    %cst_9 = arith.constant 9.99999982E-15 : f32
    %16 = vector.broadcast %cst_9 : f32 to vector<8x256xf32>
    %17 = arith.addf %15, %16 : vector<8x256xf32>
    %18 = math.sqrt %17 : vector<8x256xf32>
    %c0_10 = arith.constant 0 : index
    %c0_11 = arith.constant 0 : index
    %c0_12 = arith.constant 0 : index
    %19 = vector.load %arg5[%c0_10, %c0_11, %c0_12] : memref<1x8x256xf32, #tpu.memory_space<vmem>>, vector<1x8x256xf32>
    %20 = vector.shape_cast %19 : vector<1x8x256xf32> to vector<8x256xf32>
    %21 = vector.shape_cast %18 : vector<8x256xf32> to vector<1x8x256xf32>
    tpu.vector_store %arg5[%c0_10, %c0_11, %c0_12], %21 {strides = array<i32>} : memref<1x8x256xf32, #tpu.memory_space<vmem>>, vector<1x8x256xf32>,
    return
  }
  func.func @transform_0(%arg0: i32, %arg1: i32) -> (i32, i32, i32) {
    %c0_i32 = arith.constant 0 : i32
    %c0_i32_0 = arith.constant 0 : i32
    %c0_i32_1 = arith.constant 0 : i32
    %c0_i32_2 = arith.constant 0 : i32
    return %c0_i32, %c0_i32_0, %c0_i32_1 : i32, i32, i32
  }
  func.func @transform_1(%arg0: i32, %arg1: i32) -> (i32, i32) {
    %c0_i32 = arith.constant 0 : i32
    %c0_i32_0 = arith.constant 0 : i32
    %c0_i32_1 = arith.constant 0 : i32
    return %c0_i32, %c0_i32_0 : i32, i32
  }
  func.func @transform_2(%arg0: i32, %arg1: i32) -> (i32, i32, i32) {
    %c0_i32 = arith.constant 0 : i32
    %c0_i32_0 = arith.constant 0 : i32
    return %arg0, %c0_i32, %arg1 : i32, i32, i32
  }
  func.func @transform_3(%arg0: i32, %arg1: i32) -> (i32, i32, i32) {
    %c0_i32 = arith.constant 0 : i32
    %c0_i32_0 = arith.constant 0 : i32
    return %arg0, %c0_i32, %arg1 : i32, i32, i32
  }
}

</mosaic_0001>

<llo_original>
// kernel: l2conv2d_forward.1
$region0: #{l2conv2d_forward.1}
  #allocation0 [shape = 'u32[]', space=smem, size = 0x4, offset = 0x4, fixed_abs, tag = 'smem constant byte address 0x4 - core index']
  #allocation1 [shape = 'u32[144,128]{1,0:T(1,128)}', space=vmem, size = 0x12000, scoped, tag = 'internal scratch']
  %s0 = inlined_call_operand.vmem [shape: f32[1,8,4], index: 0, kind: input, shape index: {}]
  %s1 = inlined_call_operand.vmem [shape: f32[8,1], index: 1, kind: input, shape index: {}]
  %s2 = inlined_call_operand.vmem [shape: f32[2,4,256], index: 2, kind: input, shape index: {}]
  %s3 = inlined_call_operand.vmem [shape: f32[2,8,256], index: 3, kind: output, shape index: {}]
  %s4 = sld [smem:[#allocation0]]
  $region45: #{l2conv2d_forward.1} parent=0
    _
  %s6 = ssub.s32 1, %s4
  %s7 = scalar_select 0, %s6, %s4
  loop: start=0, step=1, limit=4
  $region2: #{l2conv2d_forward.1} parent=0 // loop_pre_header
    _
  $region3: #{l2conv2d_forward.1} parent=0 // loop_header
    %s9 = sphi 0, %s13
    %p10 = scmp.ge.s32.totalorder %s9, 4
    %s16 = sphi 0, %s28
    %s17 = sphi 0, %s24
    %s18 = sphi 0, %s16
    %s19 = sphi 0, %s17
    %s20 = sphi 0, %s18
    %s21 = sphi 0, %s19
    %s29 = sphi 0, %s29
    %s31 = sphi 0, %s29
    %s32 = sphi 0, %s31
    %s46 = sphi 0, %s32
    %s50 = sphi 0, %s50
    %s52 = sphi 0, %s50
    %s53 = sphi 0, %s52
    %s67 = sphi 0, %s53
    %s75 = sphi 0, %s77
    %s78 = sphi 0, %s75
    %s79 = sphi 0, %s78
    %s95 = sphi 0, %s79
    %s103 = sphi 0, %s105
    %s106 = sphi 0, %s103
    %s107 = sphi 0, %s106
    %s123 = sphi 0, %s107
  $region4: #{l2conv2d_forward.1} parent=0 // loop_header_branch
    %12 = sbr.rel (%p10) target = $region8
  $region5: #{l2conv2d_forward.1} parent=0 // loop_body
    %s14 = ssub.s32 %s9, 1
    %s15 = ssub.s32 %s9, 2
    %s22 = sadd.s32 1, %s17
    %p23 = scmp.ge.s32.totalorder %s22, 1
    %s24 = scalar_select %p23, 0, %s22
    %s25 = sadd.s32 1, %s16
    %s26 = scalar_select %p23, %s25, %s16
    %p27 = scmp.ge.s32.totalorder %s26, 2
    %s28 = scalar_select %p27, 0, %s26
    %s30 = sadd.s32 %s29, 1
    %p33 = scmp.eq.s32.totalorder %s9, 1
    %p34 = scmp.ne.s32.totalorder %s29, %s31
    %p35 = scmp.eq.s32.totalorder %s9, 0
    %p36 = por %p34, %p35
    %p37 = scmp.ne.s32.totalorder %s29, %s31
    %p38 = scmp.eq.s32.totalorder %s14, 1
    %p39 = por %p37, %p38
    %p40 = scmp.ne.s32.totalorder %s31, %s32
    %p41 = scmp.eq.s32.totalorder %s14, 0
    %p42 = por %p40, %p41
    %p43 = scmp.ne.s32.totalorder %s31, %s32
    %p44 = scmp.eq.s32.totalorder %s15, 1
    %p45 = por %p43, %p44
    %p47 = scmp.ne.s32.totalorder %s32, %s46
    %p48 = scmp.eq.s32.totalorder %s15, 0
    %p49 = por %p47, %p48
    %s51 = sadd.s32 %s50, 1
    %p54 = scmp.eq.s32.totalorder %s9, 1
    %p55 = scmp.ne.s32.totalorder %s50, %s52
    %p56 = scmp.eq.s32.totalorder %s9, 0
    %p57 = por %p55, %p56
    %p58 = scmp.ne.s32.totalorder %s50, %s52
    %p59 = scmp.eq.s32.totalorder %s14, 1
    %p60 = por %p58, %p59
    %p61 = scmp.ne.s32.totalorder %s52, %s53
    %p62 = scmp.eq.s32.totalorder %s14, 0
    %p63 = por %p61, %p62
    %p64 = scmp.ne.s32.totalorder %s52, %s53
    %p65 = scmp.eq.s32.totalorder %s15, 1
    %p66 = por %p64, %p65
    %p68 = scmp.ne.s32.totalorder %s53, %s67
    %p69 = scmp.eq.s32.totalorder %s15, 0
    %p70 = por %p68, %p69
    %s71 = ssub.s32 %s16, %s28
    %s72 = ssub.s32 %s17, %s24
    %s73 = sor.u32 %s71, %s72
    %p74 = scmp.eq.s32.totalorder %s73, 0
    %s76 = sadd.s32 %s75, 1
    %s77 = scalar_select %p74, %s75, %s76
    %p80 = pneg %p74
    %p81 = scmp.eq.s32.totalorder %s9, 1
    %p82 = por %p80, %p81
    %p83 = scmp.ne.s32.totalorder %s75, %s78
    %p84 = scmp.eq.s32.totalorder %s9, 0
    %p85 = por %p83, %p84
    %p86 = scmp.ne.s32.totalorder %s75, %s78
    %p87 = scmp.eq.s32.totalorder %s14, 1
    %p88 = por %p86, %p87
    %p89 = scmp.ne.s32.totalorder %s78, %s79
    %p90 = scmp.eq.s32.totalorder %s14, 0
    %p91 = por %p89, %p90
    %p92 = scmp.ne.s32.totalorder %s78, %s79
    %p93 = scmp.eq.s32.totalorder %s15, 1
    %p94 = por %p92, %p93
    %p96 = scmp.ne.s32.totalorder %s79, %s95
    %p97 = scmp.eq.s32.totalorder %s15, 0
    %p98 = por %p96, %p97
    %s99 = ssub.s32 %s16, %s28
    %s100 = ssub.s32 %s17, %s24
    %s101 = sor.u32 %s99, %s100
    %p102 = scmp.eq.s32.totalorder %s101, 0
    %s104 = sadd.s32 %s103, 1
    %s105 = scalar_select %p102, %s103, %s104
    %p108 = pneg %p102
    %p109 = scmp.eq.s32.totalorder %s9, 1
    %p110 = por %p108, %p109
    %p111 = scmp.ne.s32.totalorder %s103, %s106
    %p112 = scmp.eq.s32.totalorder %s9, 0
    %p113 = por %p111, %p112
    %p114 = scmp.ne.s32.totalorder %s103, %s106
    %p115 = scmp.eq.s32.totalorder %s14, 1
    %p116 = por %p114, %p115
    %p117 = scmp.ne.s32.totalorder %s106, %s107
    %p118 = scmp.eq.s32.totalorder %s14, 0
    %p119 = por %p117, %p118
    %p120 = scmp.ne.s32.totalorder %s106, %s107
    %p121 = scmp.eq.s32.totalorder %s15, 1
    %p122 = por %p120, %p121
    %p124 = scmp.ne.s32.totalorder %s107, %s123
    %p125 = scmp.eq.s32.totalorder %s15, 0
    %p126 = por %p124, %p125
    %p127 = scmp.le.s32.totalorder 1, %s9
    %p128 = scmp.lt.s32.totalorder %s9, 3
    %p129 = pnand %p127, %p128
    %p130 = pneg %p129
    // Predicated region
    $region9: #{l2conv2d_forward.1} parent=5 // pred_check
      _
    $region10: #{l2conv2d_forward.1} parent=5 // pred_check_branch
      %132 = sbr.rel (%p129) target = $region12
    $region11: #{l2conv2d_forward.1} parent=5 // pred_region
      %s133 = ssub.s32 %s9, 1
      // Predicated region
      $region13: #{l2conv2d_forward.1} parent=11 // pred_check
        %p134 = pneg %p42
      $region14: #{l2conv2d_forward.1} parent=11 // pred_check_branch
        %136 = sbr.rel (%p134) target = $region16
      $region15: #{l2conv2d_forward.1} parent=11 // pred_region
        _
      $region16: #{l2conv2d_forward.1} parent=11 // pred_fallthru
        _
      // Predicated region
      $region17: #{l2conv2d_forward.1} parent=11 // pred_check
        %p137 = pneg %p63
      $region18: #{l2conv2d_forward.1} parent=11 // pred_check_branch
        %139 = sbr.rel (%p137) target = $region20
      $region19: #{l2conv2d_forward.1} parent=11 // pred_region
        _
      $region20: #{l2conv2d_forward.1} parent=11 // pred_fallthru
        _
    $region12: #{l2conv2d_forward.1} parent=5 // pred_fallthru
      _
    %p140 = scmp.lt.s32.totalorder %s9, 2
    // Predicated region
    $region21: #{l2conv2d_forward.1} parent=5 // pred_check
      %p141 = pneg %p140
    $region22: #{l2conv2d_forward.1} parent=5 // pred_check_branch
      %143 = sbr.rel (%p141) target = $region24
    $region23: #{l2conv2d_forward.1} parent=5 // pred_region
      // Predicated region
      $region25: #{l2conv2d_forward.1} parent=23 // pred_check
        %p144 = pneg %p85
      $region26: #{l2conv2d_forward.1} parent=23 // pred_check_branch
        %146 = sbr.rel (%p144) target = $region28
      $region27: #{l2conv2d_forward.1} parent=23 // pred_region
        %s147 = smul.u32 2, %s17
        %p148 = scmp.lt.s32.totalorder %s16, 1
        %s149 = scalar_select %p148, %s16, 1
        %p150 = scmp.lt.s32.totalorder %s147, 1
        %s151 = scalar_select %p150, %s147, 1
        %s152 = smul.addr %s149, 2
        %s153 = sadd.s32 %s151, %s152
        %s154 = smul.addr %s153, 4
        %s155 = scalar_lea.vmem %s2, %s154
        %s156 = smul.u32 2, %s17
      $region28: #{l2conv2d_forward.1} parent=23 // pred_fallthru
        _
    $region24: #{l2conv2d_forward.1} parent=5 // pred_fallthru
      _
    %p157 = scmp.le.s32.totalorder 1, %s9
    %p158 = scmp.lt.s32.totalorder %s9, 3
    %p159 = pnand %p157, %p158
    %p160 = pneg %p159
    // Predicated region
    $region29: #{l2conv2d_forward.1} parent=5 // pred_check
      _
    $region30: #{l2conv2d_forward.1} parent=5 // pred_check_branch
      %162 = sbr.rel (%p159) target = $region32
    $region31: #{l2conv2d_forward.1} parent=5 // pred_region
      %s163 = ssub.s32 %s9, 1
      %p164 = pneg %p42
      %p165 = pneg %p39
      %p166 = pneg %p63
      %p167 = pneg %p60
      %s168 = smul.u32 2, %s19
      %p169 = scmp.lt.s32.totalorder %s18, 1
      %s170 = scalar_select %p169, %s18, 1
      %p171 = scmp.lt.s32.totalorder %s168, 1
      %s172 = scalar_select %p171, %s168, 1
      %s173 = smul.addr %s170, 2
      %s174 = sadd.s32 %s172, %s173
      %s175 = smul.addr %s174, 4
      %s176 = scalar_lea.vmem %s2, %s175
      %p177 = pneg %p91
      %p178 = pneg %p88
      %p179 = pneg %p119
      %p180 = pneg %p116
      %s181 = smul.u32 2, %s19
      %p182 = scmp.lt.s32.totalorder %s18, 1
      %s183 = scalar_select %p182, %s18, 1
      %p184 = scmp.lt.s32.totalorder %s181, 1
      %s185 = scalar_select %p184, %s181, 1
      %s186 = smul.addr %s183, 2
      %s187 = sadd.s32 %s185, %s186
      %s188 = smul.addr %s187, 8
      %s189 = scalar_lea.vmem %s3, %s188
      %s190 = smul.u32 2, %s19
      %p191 = scmp.lt.s32.totalorder %s18, 1
      %s192 = scalar_select %p191, %s18, 1
      %p193 = scmp.lt.s32.totalorder %s190, 1
      %s194 = scalar_select %p193, %s190, 1
      %s195 = smul.addr %s192, 2
      %s196 = sadd.s32 %s194, %s195
      %s197 = smul.addr %s196, 4
      %s198 = scalar_lea.vmem %s2, %s197
      %s199 = smul.u32 2, %s19
      %s200 = smul.u32 2, %s19
      %p201 = scmp.lt.s32.totalorder %s18, 1
      %s202 = scalar_select %p201, %s18, 1
      %p203 = scmp.lt.s32.totalorder %s200, 1
      %s204 = scalar_select %p203, %s200, 1
      %s205 = smul.addr %s202, 2
      %s206 = sadd.s32 %s204, %s205
      %s207 = smul.addr %s206, 8
      %s208 = scalar_lea.vmem %s3, %s207
      %s209 = smul.u32 2, %s19
      %v210 = vld [vmem:[%s198] sm:$0xff]
      %v211 = vmul.f32 %v210, %v210
      %v213 = vcombine.high %v211, %v211
      %vm215 = vcmask 1043456
      %v216 = vsel %vm215, %v211, 0.0
      %v217 = vrot.slane %v216, 4
      %v218 = vadd.f32 %v216, %v217
      %v219 = vrot.slane %v218, 2
      %v220 = vadd.f32 %v218, %v219
      %v221 = vrot.slane %v220, 1
      %v222 = vadd.f32 %v220, %v221
      %v223 = vsel %vm215, %v213, 0.0
      %v224 = vrot.slane %v223, 4
      %v225 = vadd.f32 %v223, %v224
      %v226 = vrot.slane %v225, 2
      %v227 = vadd.f32 %v225, %v226
      %v228 = vrot.slane %v227, 1
      %v229 = vadd.f32 %v227, %v228
      %v230 = vld [vmem:[%s0] sm:$0xff]
      %v232 = vcombine.high %v210, %v210
      %vm233 = vcmask 31744
      %v235 = vsel %vm233, %v230, 0
      %v237 = vsel %vm215, %v210, 0
      %v239 = vsel %vm215, %v232, 0
      %241 = vmatprep.subr.mxu0 0.0
      %242 = vmatpush1.msra.mxu0 0.0
      %243 = vmatprep.subr.mxu0 0.0
      %244 = vmatpush1.msra.mxu0 0.0
      %245 = vmatprep.subr.mxu0 0.0
      %246 = vmatpush1.msra.mxu0 0.0
      %247 = vmatprep.subr.mxu0 0.0
      %248 = vmatpush1.msra.mxu0 0.0
      %249 = vmatprep.subr.mxu0 0.0
      %250 = vmatpush1.msra.mxu0 0.0
      %251 = vmatprep.subr.mxu0 0.0
      %252 = vmatpush1.msra.mxu0 0.0
      %253 = vmatprep.subr.mxu0 0.0
      %254 = vmatpush1.msra.mxu0 0.0
      %255 = vmatprep.subr.mxu0 0.0
      %256 = vmatpush1.msra.mxu0 0.0
      %257 = vmatprep.subr.mxu0 0.0
      %258 = vmatpush1.msra.mxu0 0.0
      %259 = vmatprep.subr.mxu0 0.0
      %260 = vmatpush1.msra.mxu0 0.0
      %261 = vmatprep.subr.mxu0 0.0
      %262 = vmatpush1.msra.mxu0 0.0
      %263 = vmatprep.subr.mxu0 0.0
      %264 = vmatpush1.msra.mxu0 0.0
      %265 = vmatprep.subr.mxu0 0.0
      %266 = vmatpush1.msra.mxu0 0.0
      %267 = vmatprep.subr.mxu0 0.0
      %268 = vmatpush1.msra.mxu0 0.0
      %269 = vmatprep.subr.mxu0 0.0
      %270 = vmatpush1.msra.mxu0 0.0
      %271 = vmatprep.subr.mxu0 %v239
      %272 = vmatpush1.msra.mxu0 %v237
      %273 = vmatprep.subr.mxu0 0.0
      %274 = vmatpush2.msra.mxu0 0.0
      %275 = vmatprep.subr.mxu0 0.0
      %276 = vmatpush2.msra.mxu0 0.0
      %277 = vmatprep.subr.mxu0 0.0
      %278 = vmatpush2.msra.mxu0 0.0
      %279 = vmatprep.subr.mxu0 0.0
      %280 = vmatpush2.msra.mxu0 0.0
      %281 = vmatprep.subr.mxu0 0.0
      %282 = vmatpush2.msra.mxu0 0.0
      %283 = vmatprep.subr.mxu0 0.0
      %284 = vmatpush2.msra.mxu0 0.0
      %285 = vmatprep.subr.mxu0 0.0
      %286 = vmatpush2.msra.mxu0 0.0
      %287 = vmatprep.subr.mxu0 0.0
      %288 = vmatpush2.msra.mxu0 0.0
      %289 = vmatprep.subr.mxu0 0.0
      %290 = vmatpush2.msra.mxu0 0.0
      %291 = vmatprep.subr.mxu0 0.0
      %292 = vmatpush2.msra.mxu0 0.0
      %293 = vmatprep.subr.mxu0 0.0
      %294 = vmatpush2.msra.mxu0 0.0
      %295 = vmatprep.subr.mxu0 0.0
      %296 = vmatpush2.msra.mxu0 0.0
      %297 = vmatprep.subr.mxu0 0.0
      %298 = vmatpush2.msra.mxu0 0.0
      %299 = vmatprep.subr.mxu0 0.0
      %300 = vmatpush2.msra.mxu0 0.0
      %301 = vmatprep.subr.mxu0 0.0
      %302 = vmatpush2.msra.mxu0 0.0
      %303 = vmatprep.subr.mxu0 0.0
      %304 = vmatpush2.msra.mxu0 0.0
      %305 = vmatprep.mubr.f32.mxu0 0.0
      %306 = vmatmul.mubr.f32.gmra.mxu0 %v235
      %v307 = vpop.f32.mrf.mxu0
      %v308 = vadd.f32 0.0, %v307
      %v309 = vpop.f32.mrf.mxu0
      %v310 = vadd.f32 0.0, %v309
      %311 = vdwg.mxu0
      %v312 = vld [vmem:[%s1] sm:$0xff]
      %314 = vset.pattern.permute.xlu0 0
      %315 = vperm.xlu0 %314, %v312
      %v316 = vpop.permute.xlu0 %315
      %v318 = vadd.f32 %v316, %v222
      %v319 = vadd.f32 %v316, %v229
      %v320 = vmul.f32 %v308, 2.0
      %v321 = vmul.f32 %v310, 2.0
      %v322 = vsub.f32 %v318, %v320
      %v323 = vsub.f32 %v319, %v321
      %v324 = vand.u32 2147483647, %v322
      %v325 = vand.u32 2147483647, %v323
      %v326 = vadd.f32 %v324, 1e-14
      %v327 = vadd.f32 %v325, 1e-14
      %v328 = vrsqrt.pop %v326
      %v329 = vmul.f32 %v326, %v328
      %vm330 = vcmp.eq.f32.partialorder %v326, inf
      %v331 = vsel %vm330, %v326, %v329
      %vm332 = vcmp.eq.f32.partialorder %v326, 0.0
      %v333 = vand.u32 %v326, 2147483648
      %v334 = vsel %vm332, %v333, %v331
      %v335 = vrsqrt.pop %v327
      %v336 = vmul.f32 %v327, %v335
      %vm337 = vcmp.eq.f32.partialorder %v327, inf
      %v338 = vsel %vm337, %v327, %v336
      %vm339 = vcmp.eq.f32.partialorder %v327, 0.0
      %v340 = vand.u32 %v327, 2147483648
      %v341 = vsel %vm339, %v340, %v338
      %342 = vst [vmem:[%s208] sm:$0xff] %v334
      %343 = vst [vmem:[%s208 + $0x8] sm:$0xff] %v341
      %s344 = smul.u32 2, %s19
      %p345 = scmp.lt.s32.totalorder %s18, 1
      %s346 = scalar_select %p345, %s18, 1
      %p347 = scmp.lt.s32.totalorder %s344, 1
      %s348 = scalar_select %p347, %s344, 1
      %s349 = smul.addr %s346, 2
      %s350 = sadd.s32 %s348, %s349
      %s351 = smul.addr %s350, 8
      %s352 = scalar_lea.vmem %s3, %s351
      // Predicated region
      $region33: #{l2conv2d_forward.1} parent=31 // pred_check
        %p353 = pneg %p116
      $region34: #{l2conv2d_forward.1} parent=31 // pred_check_branch
        %355 = sbr.rel (%p353) target = $region36
      $region35: #{l2conv2d_forward.1} parent=31 // pred_region
        %s356 = smul.u32 2, %s19
      $region36: #{l2conv2d_forward.1} parent=31 // pred_fallthru
        _
    $region32: #{l2conv2d_forward.1} parent=5 // pred_fallthru
      _
    %p357 = scmp.le.s32.totalorder 2, %s9
    // Predicated region
    $region37: #{l2conv2d_forward.1} parent=5 // pred_check
      %p358 = pneg %p357
    $region38: #{l2conv2d_forward.1} parent=5 // pred_check_branch
      %360 = sbr.rel (%p358) target = $region40
    $region39: #{l2conv2d_forward.1} parent=5 // pred_region
      %s361 = ssub.s32 %s9, 2
      // Predicated region
      $region41: #{l2conv2d_forward.1} parent=39 // pred_check
        %p362 = pneg %p122
      $region42: #{l2conv2d_forward.1} parent=39 // pred_check_branch
        %364 = sbr.rel (%p362) target = $region44
      $region43: #{l2conv2d_forward.1} parent=39 // pred_region
        %s365 = smul.u32 2, %s21
        %p366 = scmp.lt.s32.totalorder %s20, 1
        %s367 = scalar_select %p366, %s20, 1
        %p368 = scmp.lt.s32.totalorder %s365, 1
        %s369 = scalar_select %p368, %s365, 1
        %s370 = smul.addr %s367, 2
        %s371 = sadd.s32 %s369, %s370
        %s372 = smul.addr %s371, 8
        %s373 = scalar_lea.vmem %s3, %s372
      $region44: #{l2conv2d_forward.1} parent=39 // pred_fallthru
        _
    $region40: #{l2conv2d_forward.1} parent=5 // pred_fallthru
      _
  $region6: #{l2conv2d_forward.1} parent=0 // loop_footer
    %s13 = sadd.s32 1, %s9
  $region7: #{l2conv2d_forward.1} parent=0 // loop_footer_branch
    %8 = sbr.rel target = $region3
  $region8: #{l2conv2d_forward.1} parent=0 // loop_exit
    _

</llo_original>
